<compile_context>
chip_gen: v5e
topology: v5e:2x2
jax: 0.10.0
libtpu: 0.0.40
codegen_flags: <defaults>
</compile_context>

<pallas_src>
import functools

import jax
import jax.numpy as jnp
from jax.experimental import pallas as pl
from jax.experimental.pallas import tpu as pltpu

EPS = 1e-5        # nn.BatchNorm1d default eps
N_PAD = 128       # lane-dense width for features / outputs (>= emb_dim, >= A+1)


def _mlp_kernel(idx_ref, slab_ref, w_ref, out_ref, *, v_rows):
    # idx_ref:  (B, 1)        int32  state indices
    # slab_ref: (rows, 128)   f32    rows 0..V-1 = emb (padded lanes 0),
    #                                row V = gamma, V+1 = beta, V+2 = bias
    # w_ref:    (128, 128)    f32    linear weight, zero-padded rows & cols
    # out_ref:  (B, 128)      f32    lane-dense padded output
    B = idx_ref.shape[0]

    emb = slab_ref[0:v_rows, :]                                  # (V, 128)
    gamma = slab_ref[v_rows:v_rows + 1, :]                       # (1, 128)
    beta = slab_ref[v_rows + 1:v_rows + 2, :]                    # (1, 128)
    bias = slab_ref[v_rows + 2:v_rows + 3, :]                    # (1, 128)

    # ---- Fused embedding gather: one-hot (B,V) @ (V,128) on the MXU ----
    idx = idx_ref[...]                                           # (B, 1) int32
    iota = jax.lax.broadcasted_iota(jnp.int32, (B, v_rows), 1)   # (B, V)
    onehot = (iota == idx).astype(jnp.float32)                   # (B, V)
    x = jnp.dot(onehot, emb, preferred_element_type=jnp.float32)  # (B, 128)

    # ---- BatchNorm1d (train mode, biased batch stats), single pass ----
    inv_b = 1.0 / B                                              # static
    s = jnp.sum(x, axis=0, keepdims=True)                        # (1, 128) XLU
    sq = jnp.sum(x * x, axis=0, keepdims=True)                   # (1, 128) XLU
    mean = s * inv_b
    var = jnp.maximum(sq * inv_b - mean * mean, 0.0)             # clamp >= 0
    inv_std = jax.lax.rsqrt(var + EPS)                           # EUP
    scale = gamma * inv_std                                      # folded affine
    shift = beta - mean * scale
    h = jnp.tanh(x * scale + shift)                              # EUP tanh
    # Padded feature lanes: x=0, gamma=0 -> scale=0, shift=0 -> h=tanh(0)=0.

    # ---- Linear: (B,128) @ (128,128) + bias; unmasked lane-dense store ----
    out_ref[...] = (jnp.dot(h, w_ref[...],
                            preferred_element_type=jnp.float32) + bias)


def prepare_params(emb_table, gamma, beta, w_t, bias):
    """One-time (outside the per-step hot path) packing of all parameters.

    emb_table: (V, E); gamma/beta: (E,); w_t: (E, n_out) pre-transposed linear
    weight; bias: (n_out,).  Returns (slab, w_pad):
      slab:  (ceil((V+3)/8)*8, 128) with emb / gamma / beta / bias rows
      w_pad: (128, 128) zero-padded weight
    """
    V, E = emb_table.shape
    n_out = w_t.shape[1]
    assert E <= N_PAD and n_out <= N_PAD
    rows_pad = ((V + 3 + 7) // 8) * 8
    slab = jnp.zeros((rows_pad, N_PAD), jnp.float32)
    slab = slab.at[:V, :E].set(jnp.asarray(emb_table, jnp.float32))
    slab = slab.at[V, :E].set(jnp.asarray(gamma, jnp.float32))
    slab = slab.at[V + 1, :E].set(jnp.asarray(beta, jnp.float32))
    slab = slab.at[V + 2, :n_out].set(jnp.asarray(bias, jnp.float32))
    # TODO(synk): for large-batch v6e/v7x runs, pre-cast w_pad (and emb rows)
    # to bf16 here and cast h to bf16 before the final dot (kept f32 for
    # bit-exactness against the PyTorch reference at tiny B).
    w_pad = jnp.zeros((N_PAD, N_PAD), jnp.float32).at[:E, :n_out].set(
        jnp.asarray(w_t, jnp.float32))
    return slab, w_pad


@functools.partial(jax.jit, static_argnums=(3, 4))
def mlp_forward(indices, slab, w_pad, num_embeddings, n_actions):
    """indices: (B,) int32 ; slab: (rows,128) ; w_pad: (128,128)
       -> (values (B,), logits (B, n_actions))"""
    B = indices.shape[0]
    V = num_embeddings

    cost = pl.CostEstimate(
        flops=2 * B * V * N_PAD + 2 * B * N_PAD * N_PAD + 8 * B * N_PAD,
        transcendentals=B * N_PAD + N_PAD,                 # tanh + rsqrt
        bytes_accessed=4 * (B + slab.size + w_pad.size + B * N_PAD),
    )

    kernel = functools.partial(_mlp_kernel, v_rows=V)

    out = pl.pallas_call(
        kernel,
        out_shape=jax.ShapeDtypeStruct((B, N_PAD), jnp.float32),
        in_specs=[
            pl.BlockSpec(memory_space=pltpu.MemorySpace.VMEM),  # indices
            pl.BlockSpec(memory_space=pltpu.MemorySpace.VMEM),  # params slab
            pl.BlockSpec(memory_space=pltpu.MemorySpace.VMEM),  # weight (padded)
        ],
        out_specs=pl.BlockSpec(memory_space=pltpu.MemorySpace.VMEM),
        compiler_params=pltpu.CompilerParams(
            # Headroom beyond v5e's 16 MiB scoped default; well under physical
            # VMEM on every generation (v7x physical = 64 MiB).
            vmem_limit_bytes=32 * 1024 * 1024,
        ),
        cost_estimate=cost,
    )(
        indices.reshape(B, 1).astype(jnp.int32),
        slab,
        w_pad,
    )

    # Padded weight/bias columns are zero, so columns >= n_actions+1 are 0.0
    # (inert) -- slice before any downstream softmax over the full slab.
    values = out[:, 0]
    logits = out[:, 1:n_actions + 1]
    return values, logits


if __name__ == "__main__":
    # Small deterministic config consistent with MLP_model(size, goal, emb_dim, n_actions)
    size = 4
    emb_dim = 32
    n_actions = 5
    batch = 8

    key = jax.random.PRNGKey(0)
    k_emb, k_w, k_b, k_idx = jax.random.split(key, 4)

    # Parameter init (deterministic, synthetic):
    emb_table = jax.random.normal(k_emb, (size * size, emb_dim), dtype=jnp.float32)
    gamma = jnp.ones((emb_dim,), dtype=jnp.float32)   # BatchNorm1d default weight
    beta = jnp.zeros((emb_dim,), dtype=jnp.float32)   # BatchNorm1d default bias
    # Linear(emb_dim, n_actions+1): weight stored pre-transposed (E, A+1)
    lim = 1.0 / jnp.sqrt(emb_dim)
    w_t = jax.random.uniform(k_w, (emb_dim, n_actions + 1),
                             minval=-lim, maxval=lim, dtype=jnp.float32)
    bias = jax.random.uniform(k_b, (n_actions + 1,),
                              minval=-lim, maxval=lim, dtype=jnp.float32)

    # One-time param packing (outside the per-step hot path).
    slab, w_pad = prepare_params(emb_table, gamma, beta, w_t, bias)
    slab, w_pad = jax.block_until_ready((slab, w_pad))

    # Example input: grid-cell indices in [0, size*size)
    indices = jax.random.randint(k_idx, (batch,), 0, size * size, dtype=jnp.int32)

    values, logits = mlp_forward(indices, slab, w_pad, size * size, n_actions)
    jax.block_until_ready((values, logits))

    assert values.shape == (batch,)
    assert logits.shape == (batch, n_actions)

    # Pure-JAX reference (same math as PyTorch train-mode forward).
    x_ref = jnp.take(emb_table, indices, axis=0)
    mu = x_ref.mean(axis=0, keepdims=True)
    var = ((x_ref - mu) ** 2).mean(axis=0, keepdims=True)
    h_ref = jnp.tanh((x_ref - mu) / jnp.sqrt(var + EPS) * gamma + beta)
    out_ref = h_ref @ w_t + bias
    assert jnp.allclose(values, out_ref[:, 0], atol=1e-4, rtol=1e-4)
    assert jnp.allclose(logits, out_ref[:, 1:], atol=1e-4, rtol=1e-4)

    print("KERNEL_OK")
</pallas_src>

<mosaic_0001>
module attributes {stable_mosaic.version = 11 : i64} {
  func.func @_mlp_kernel(%arg0: memref<8x1xi32, #tpu.memory_space<vmem>>, %arg1: memref<24x128xf32, #tpu.memory_space<vmem>>, %arg2: memref<128x128xf32, #tpu.memory_space<vmem>>, %arg3: memref<8x128xf32, #tpu.memory_space<vmem>>) attributes {dimension_semantics = [], scalar_prefetch = 0 : i64, scratch_operands = 0 : i64, tpu.core_type = #tpu.core_type<tc>} {
    %c0 = arith.constant 0 : index
    %c0_0 = arith.constant 0 : index
    %0 = vector.load %arg1[%c0, %c0_0] : memref<24x128xf32, #tpu.memory_space<vmem>>, vector<16x128xf32>
    %c16 = arith.constant 16 : index
    %c0_1 = arith.constant 0 : index
    %1 = vector.load %arg1[%c16, %c0_1] : memref<24x128xf32, #tpu.memory_space<vmem>>, vector<1x128xf32>
    %c17 = arith.constant 17 : index
    %c0_2 = arith.constant 0 : index
    %2 = vector.load %arg1[%c17, %c0_2] : memref<24x128xf32, #tpu.memory_space<vmem>>, vector<1x128xf32>
    %c18 = arith.constant 18 : index
    %c0_3 = arith.constant 0 : index
    %3 = vector.load %arg1[%c18, %c0_3] : memref<24x128xf32, #tpu.memory_space<vmem>>, vector<1x128xf32>
    %c0_4 = arith.constant 0 : index
    %c0_5 = arith.constant 0 : index
    %4 = vector.load %arg0[%c0_4, %c0_5] : memref<8x1xi32, #tpu.memory_space<vmem>>, vector<8x1xi32>
    %5 = tpu.iota {dimensions = array<i32: 1>} : vector<8x16xi32>
    %6 = vector.broadcast %4 : vector<8x1xi32> to vector<8x16xi32>
    %7 = arith.cmpi eq, %5, %6 : vector<8x16xi32>
    %8 = arith.extui %7 : vector<8x16xi1> to vector<8x16xi32>
    %9 = arith.sitofp %8 : vector<8x16xi32> to vector<8x16xf32>
    %cst = arith.constant dense<0.000000e+00> : vector<8x128xf32>
    %10 = tpu.matmul %9, %0, %cst {dimension_numbers = #tpu.dot_dimension_numbers<[1], [0], [0], [1], [0, 0, 1, 1], [], []>} : vector<8x16xf32>, vector<16x128xf32>, vector<8x128xf32> -> vector<8x128xf32>
    %cst_6 = arith.constant dense<0.000000e+00> : vector<128xf32>
    %11 = vector.multi_reduction <add>, %10, %cst_6 [0] : vector<8x128xf32> to vector<128xf32>
    %12 = vector.shape_cast %11 : vector<128xf32> to vector<1x128xf32>
    %13 = arith.mulf %10, %10 : vector<8x128xf32>
    %cst_7 = arith.constant dense<0.000000e+00> : vector<128xf32>
    %14 = vector.multi_reduction <add>, %13, %cst_7 [0] : vector<8x128xf32> to vector<128xf32>
    %15 = vector.shape_cast %14 : vector<128xf32> to vector<1x128xf32>
    %cst_8 = arith.constant 1.250000e-01 : f32
    %16 = vector.broadcast %cst_8 : f32 to vector<1x128xf32>
    %17 = arith.mulf %12, %16 : vector<1x128xf32>
    %cst_9 = arith.constant 1.250000e-01 : f32
    %18 = vector.broadcast %cst_9 : f32 to vector<1x128xf32>
    %19 = arith.mulf %15, %18 : vector<1x128xf32>
    %20 = arith.mulf %17, %17 : vector<1x128xf32>
    %21 = arith.subf %19, %20 : vector<1x128xf32>
    %cst_10 = arith.constant 0.000000e+00 : f32
    %22 = vector.broadcast %cst_10 : f32 to vector<1x128xf32>
    %23 = arith.maximumf %21, %22 : vector<1x128xf32>
    %cst_11 = arith.constant 9.99999974E-6 : f32
    %24 = vector.broadcast %cst_11 : f32 to vector<1x128xf32>
    %25 = arith.addf %23, %24 : vector<1x128xf32>
    %26 = math.rsqrt %25 : vector<1x128xf32>
    %27 = arith.mulf %1, %26 : vector<1x128xf32>
    %28 = arith.mulf %17, %27 : vector<1x128xf32>
    %29 = arith.subf %2, %28 : vector<1x128xf32>
    %30 = vector.broadcast %27 : vector<1x128xf32> to vector<8x128xf32>
    %31 = arith.mulf %10, %30 : vector<8x128xf32>
    %32 = vector.broadcast %29 : vector<1x128xf32> to vector<8x128xf32>
    %33 = arith.addf %31, %32 : vector<8x128xf32>
    %34 = math.tanh %33 : vector<8x128xf32>
    %c0_12 = arith.constant 0 : index
    %c0_13 = arith.constant 0 : index
    %35 = vector.load %arg2[%c0_12, %c0_13] : memref<128x128xf32, #tpu.memory_space<vmem>>, vector<128x128xf32>
    %cst_14 = arith.constant dense<0.000000e+00> : vector<8x128xf32>
    %36 = tpu.matmul %34, %35, %cst_14 {dimension_numbers = #tpu.dot_dimension_numbers<[1], [0], [0], [1], [0, 0, 1, 1], [], []>} : vector<8x128xf32>, vector<128x128xf32>, vector<8x128xf32> -> vector<8x128xf32>
    %37 = vector.broadcast %3 : vector<1x128xf32> to vector<8x128xf32>
    %38 = arith.addf %36, %37 : vector<8x128xf32>
    %c0_15 = arith.constant 0 : index
    %c0_16 = arith.constant 0 : index
    %39 = vector.load %arg3[%c0_15, %c0_16] : memref<8x128xf32, #tpu.memory_space<vmem>>, vector<8x128xf32>
    tpu.vector_store %arg3[%c0_15, %c0_16], %38 {strides = array<i32>} : memref<8x128xf32, #tpu.memory_space<vmem>>, vector<8x128xf32>,
    return
  }
}

</mosaic_0001>

<llo_original>
// kernel: mlp_forward.1
$region0: #{mlp_forward.1}
  #allocation0 [shape = 'u32[]', space=smem, size = 0x4, offset = 0x4, fixed_abs, tag = 'smem constant byte address 0x4 - core index']
  #allocation1 [shape = 'u32[72,128]{1,0:T(1,128)}', space=vmem, size = 0x9000, scoped, tag = 'internal scratch']
  %s0 = inlined_call_operand.vmem [shape: s32[8,1], index: 0, kind: input, shape index: {}]
  %s1 = inlined_call_operand.hbm [shape: f32[24,128], index: 1, kind: input, shape index: {}]
  %s2 = inlined_call_operand.hbm [shape: f32[128,128], index: 2, kind: input, shape index: {}]
  %s3 = inlined_call_operand.vmem [shape: f32[8,128], index: 3, kind: output, shape index: {}]
  %s4 = sld [smem:[#allocation0]]
  $region30: #{mlp_forward.1} parent=0
    _
  %s6 = ssub.s32 1, %s4
  %s7 = scalar_select 0, %s6, %s4
  $region1: #{mlp_forward.1} parent=0
    #allocation2 [shape = 'u8[12288]{0}', space=vmem, size = 0x3000, scoped, tag = 'input window, operand 1, single buffered']
    #allocation3 [shape = 's32[1]{0}', space=sflag, size = 0x4, scoped, tag = 'scoped memory for mlp_forward.1']
    #allocation4 [shape = 'u8[65536]{0}', space=vmem, size = 0x10000, scoped, tag = 'input window, operand 2, single buffered']
    #allocation5 [shape = 's32[1]{0}', space=sflag, size = 0x4, scoped, tag = 'scoped memory for mlp_forward.1']
    %8 = vsyncpa [#allocation3], 0
    %9 = vsyncpa [#allocation5], 0
    // Predicated region
    $region2: #{mlp_forward.1} parent=1 // pred_check
      _
    $region3: #{mlp_forward.1} parent=1 // pred_check_branch
      %11 = sbr.rel (0) target = $region5
    $region4: #{mlp_forward.1} parent=1 // pred_region
      _
    $region5: #{mlp_forward.1} parent=1 // pred_fallthru
      _
    // Predicated region
    $region6: #{mlp_forward.1} parent=1 // pred_check
      _
    $region7: #{mlp_forward.1} parent=1 // pred_check_branch
      %13 = sbr.rel (0) target = $region9
    $region8: #{mlp_forward.1} parent=1 // pred_region
      %15 = vsyncadd [#allocation3], 0
      %s16 = sshll.u32 %s1, 4
      %s17 = int_to_ptr.hbm [resolvable:$true] %s16
      %s18 = sshll.u32 [#allocation2], 4
      %s19 = int_to_ptr.vmem [resolvable:$true] %s18
      %24 = dma.hbm_to_vmem [thread:$0]  %s17, 384, %s19, [#allocation3], 128, 128, 8
    $region9: #{mlp_forward.1} parent=1 // pred_fallthru
      _
    // Predicated region
    $region10: #{mlp_forward.1} parent=1 // pred_check
      _
    $region11: #{mlp_forward.1} parent=1 // pred_check_branch
      %26 = sbr.rel (0) target = $region13
    $region12: #{mlp_forward.1} parent=1 // pred_region
      %28 = vsyncadd [#allocation5], 0
      %s29 = sshll.u32 %s2, 4
      %s30 = int_to_ptr.hbm [resolvable:$true] %s29
      %s31 = sshll.u32 [#allocation4], 4
      %s32 = int_to_ptr.vmem [resolvable:$true] %s31
      %37 = dma.hbm_to_vmem [thread:$0]  %s30, 2048, %s32, [#allocation5], 128, 128, 8
    $region13: #{mlp_forward.1} parent=1 // pred_fallthru
      _
    // Predicated region
    $region14: #{mlp_forward.1} parent=1 // pred_check
      _
    $region15: #{mlp_forward.1} parent=1 // pred_check_branch
      %39 = sbr.rel (0) target = $region17
    $region16: #{mlp_forward.1} parent=1 // pred_region
      %41 = dma.done [#allocation3], 384
    $region17: #{mlp_forward.1} parent=1 // pred_fallthru
      _
    // Predicated region
    $region18: #{mlp_forward.1} parent=1 // pred_check
      _
    $region19: #{mlp_forward.1} parent=1 // pred_check_branch
      %43 = sbr.rel (0) target = $region21
    $region20: #{mlp_forward.1} parent=1 // pred_region
      %45 = dma.done [#allocation5], 2048
    $region21: #{mlp_forward.1} parent=1 // pred_fallthru
      _
    %v46 = vld [vmem:[#allocation2] sm:$0xff]
    %v47 = vld [vmem:[#allocation2 + $0x8] sm:$0xff]
    %v48 = vld [vmem:[#allocation2 + $0x10] sm:$0x1]
    %v49 = vld [vmem:[#allocation2 + $0x11] sm:$0x1]
    %v50 = vld [vmem:[#allocation2 + $0x12] sm:$0x1]
    %v51 = vld [vmem:[%s0] sm:$0xff]
    %v52 = vlaneseq
    %v53 = vand.u32 %v52, 127
    %54 = vset.pattern.permute.xlu0 0
    %55 = vperm.xlu0 %54, %v51
    %v56 = vpop.permute.xlu0 %55
    %vm57 = vcmp.eq.s32.totalorder %v53, %v56
    %v58 = vsel %vm57, 1, 0
    %v59 = vcvt.s32.f32 %v58
    %vm60 = vcmask 130048
    %v62 = vsel %vm60, %v59, 0
    %64 = vmatpush.msra.mxu0 0.0
    %65 = vmatpush.msra.mxu0 0.0
    %66 = vmatpush.msra.mxu0 0.0
    %67 = vmatpush.msra.mxu0 0.0
    %68 = vmatpush.msra.mxu0 0.0
    %69 = vmatpush.msra.mxu0 0.0
    %70 = vmatpush.msra.mxu0 0.0
    %71 = vmatpush.msra.mxu0 0.0
    %72 = vmatpush.msra.mxu0 0.0
    %73 = vmatpush.msra.mxu0 0.0
    %74 = vmatpush.msra.mxu0 0.0
    %75 = vmatpush.msra.mxu0 0.0
    %76 = vmatpush.msra.mxu0 0.0
    %77 = vmatpush.msra.mxu0 0.0
    %78 = vmatpush.msra.mxu0 %v47
    %79 = vmatpush.msra.mxu0 %v46
    %80 = vmatmul.f32.gmra.mxu0 %v62
    %v81 = vpop.f32.mrf.mxu0
    %v82 = vadd.f32 0.0, %v81
    %83 = vdwg.mxu0
    %v84 = vrot.slane %v82, 4
    %v85 = vadd.f32 %v82, %v84
    %v86 = vrot.slane %v85, 2
    %v87 = vadd.f32 %v85, %v86
    %v88 = vrot.slane %v87, 1
    %v89 = vadd.f32 %v87, %v88
    %v90 = vmul.f32 %v82, %v82
    %v91 = vrot.slane %v90, 4
    %v92 = vadd.f32 %v90, %v91
    %v93 = vrot.slane %v92, 2
    %v94 = vadd.f32 %v92, %v93
    %v95 = vrot.slane %v94, 1
    %v96 = vadd.f32 %v94, %v95
    %v97 = vmul.f32 %v89, 0.125
    %v98 = vmul.f32 %v96, 0.125
    %v99 = vmul.f32 %v97, %v97
    %v100 = vsub.f32 %v98, %v99
    %v101 = vmax.f32 %v100, 0.0
    %v102 = vadd.f32 %v101, 1e-05
    %v103 = vrsqrt.pop %v102
    %v104 = vmul.f32 %v103, %v102
    %v105 = vmul.f32 %v104, %v103
    %v106 = vmul.f32 0.5, %v105
    %v107 = vsub.f32 1.5, %v106
    %v108 = vmul.f32 %v103, %v107
    %vm109 = vweird.f32 %v102
    %vm110 = vweird.f32 %v103
    %vm111 = vmor %vm109, %vm110
    %v112 = vsel %vm111, %v103, %v108
    %v113 = vmul.f32 %v48, %v112
    %v114 = vmul.f32 %v97, %v113
    %v115 = vsub.f32 %v49, %v114
    %v116 = vperm.slane %v113, 0
    %v117 = vmul.f32 %v82, %v116
    %v118 = vperm.slane %v115, 0
    %v119 = vadd.f32 %v117, %v118
    %v120 = vtanh.pop %v119
    %v121 = vld [vmem:[#allocation4] sm:$0xff]
    %v122 = vld [vmem:[#allocation4 + $0x8] sm:$0xff]
    %v123 = vld [vmem:[#allocation4 + $0x10] sm:$0xff]
    %v124 = vld [vmem:[#allocation4 + $0x18] sm:$0xff]
    %v125 = vld [vmem:[#allocation4 + $0x20] sm:$0xff]
    %v126 = vld [vmem:[#allocation4 + $0x28] sm:$0xff]
    %v127 = vld [vmem:[#allocation4 + $0x30] sm:$0xff]
    %v128 = vld [vmem:[#allocation4 + $0x38] sm:$0xff]
    %v129 = vld [vmem:[#allocation4 + $0x40] sm:$0xff]
    %v130 = vld [vmem:[#allocation4 + $0x48] sm:$0xff]
    %v131 = vld [vmem:[#allocation4 + $0x50] sm:$0xff]
    %v132 = vld [vmem:[#allocation4 + $0x58] sm:$0xff]
    %v133 = vld [vmem:[#allocation4 + $0x60] sm:$0xff]
    %v134 = vld [vmem:[#allocation4 + $0x68] sm:$0xff]
    %v135 = vld [vmem:[#allocation4 + $0x70] sm:$0xff]
    %v136 = vld [vmem:[#allocation4 + $0x78] sm:$0xff]
    %v137 = vperm.slane %v50, 0
    %138 = vmatpush.msra.mxu0 %v136
    %139 = vmatpush.msra.mxu0 %v135
    %140 = vmatpush.msra.mxu0 %v134
    %141 = vmatpush.msra.mxu0 %v133
    %142 = vmatpush.msra.mxu0 %v132
    %143 = vmatpush.msra.mxu0 %v131
    %144 = vmatpush.msra.mxu0 %v130
    %145 = vmatpush.msra.mxu0 %v129
    %146 = vmatpush.msra.mxu0 %v128
    %147 = vmatpush.msra.mxu0 %v127
    %148 = vmatpush.msra.mxu0 %v126
    %149 = vmatpush.msra.mxu0 %v125
    %150 = vmatpush.msra.mxu0 %v124
    %151 = vmatpush.msra.mxu0 %v123
    %152 = vmatpush.msra.mxu0 %v122
    %153 = vmatpush.msra.mxu0 %v121
    %154 = vmatmul.f32.gmra.mxu0 %v120
    %v155 = vpop.f32.mrf.mxu0
    %v156 = vadd.f32 %v137, %v155
    %157 = vdwg.mxu0
    %158 = vst [vmem:[%s3] sm:$0xff] %v156
    // Predicated region
    $region22: #{mlp_forward.1} parent=1 // pred_check
      _
    $region23: #{mlp_forward.1} parent=1 // pred_check_branch
      %160 = sbr.rel (0) target = $region25
    $region24: #{mlp_forward.1} parent=1 // pred_region
      _
    $region25: #{mlp_forward.1} parent=1 // pred_fallthru
      _
    // Predicated region
    $region26: #{mlp_forward.1} parent=1 // pred_check
      _
    $region27: #{mlp_forward.1} parent=1 // pred_check_branch
      %162 = sbr.rel (0) target = $region29
    $region28: #{mlp_forward.1} parent=1 // pred_region
      _
    $region29: #{mlp_forward.1} parent=1 // pred_fallthru
      _
    %163 = vsyncpa [#allocation3], 1
    %164 = vsyncpa [#allocation5], 1

</llo_original>
